<compile_context>
chip_gen: v5e
topology: v5e:2x2
jax: 0.10.0
libtpu: 0.0.40
codegen_flags: <defaults>
</compile_context>

<pallas_src>
import functools

import jax
import jax.numpy as jnp
from jax.experimental import pallas as pl
from jax.experimental.pallas import tpu as pltpu


def _round_up(x, m):
    return (x + m - 1) // m * m


def _pick_tile(dim_padded, candidates=(512, 256, 128)):
    for c in candidates:
        if dim_padded % c == 0:
            return c
    return dim_padded  # unreachable: dim_padded is a multiple of 128


def _local_reparam_kernel(x_ref, wmu_ref, sw2_ref, bmu_ref, sb_ref,
                          epsw_ref, epsb_ref, o_ref, acc_mu, acc_var):
    """Grid = (B tiles, n_out tiles, n_in reduction tiles)."""
    k = pl.program_id(2)

    @pl.when(k == 0)
    def _():
        acc_mu[...] = jnp.zeros_like(acc_mu)
        acc_var[...] = jnp.zeros_like(acc_var)

    x = x_ref[...]                         # [tb, tk] f32
    x2 = x * x                             # square in f32, then cast
    # Two MXU matmuls, bf16 operands, f32 accumulation.
    acc_mu[...] += jnp.dot(x.astype(jnp.bfloat16), wmu_ref[...],
                           preferred_element_type=jnp.float32)
    acc_var[...] += jnp.dot(x2.astype(jnp.bfloat16), sw2_ref[...],
                            preferred_element_type=jnp.float32)

    @pl.when(k == pl.num_programs(2) - 1)
    def _():
        act_std = jnp.sqrt(1e-4 + acc_var[...])
        out = acc_mu[...] + act_std * epsw_ref[...]
        out = out + bmu_ref[...] + sb_ref[...] * epsb_ref[...]
        o_ref[...] = jnp.maximum(out, 0.0)     # ReLU


@functools.partial(jax.jit, static_argnames=())
def local_reparam_block(x, w_mu, w_p, b_mu, b_p, eps_w, eps_b):
    B, n_in = x.shape
    n_out = w_mu.shape[1]

    # --- hoisted parameter transforms (computed once per param set) ---------
    # Numerically stable softplus: logaddexp(0, x) == log1p(exp(x)) without
    # overflow for large positive x.
    sw2 = jnp.square(jnp.logaddexp(0.0, w_p)).astype(jnp.bfloat16)   # softplus(W_p)^2
    std_b = jnp.logaddexp(0.0, b_p).astype(jnp.float32)              # softplus(b_p)
    w_mu_bf = w_mu.astype(jnp.bfloat16)

    # --- lane/sublane-dense padded layout -----------------------------------
    Kp = _round_up(n_in, 128)
    Np = _round_up(n_out, 128)
    tb = 128 if B >= 128 else _round_up(B, 8)
    Bp = _round_up(B, tb)
    tk = _pick_tile(Kp)
    tn = _pick_tile(Np)

    xp = jnp.pad(x.astype(jnp.float32), ((0, Bp - B), (0, Kp - n_in)))
    wmup = jnp.pad(w_mu_bf, ((0, Kp - n_in), (0, Np - n_out)))
    sw2p = jnp.pad(sw2, ((0, Kp - n_in), (0, Np - n_out)))
    bmup = jnp.pad(b_mu.astype(jnp.float32), ((0, 0), (0, Np - n_out)))
    sbp = jnp.pad(std_b, ((0, 0), (0, Np - n_out)))
    ewp = jnp.pad(eps_w.astype(jnp.float32), ((0, Bp - B), (0, Np - n_out)))
    ebp = jnp.pad(eps_b.astype(jnp.float32), ((0, Bp - B), (0, Np - n_out)))

    grid = (Bp // tb, Np // tn, Kp // tk)

    out = pl.pallas_call(
        _local_reparam_kernel,
        out_shape=jax.ShapeDtypeStruct((Bp, Np), jnp.float32),
        grid_spec=pltpu.PrefetchScalarGridSpec(
            num_scalar_prefetch=0,
            grid=grid,
            in_specs=[
                pl.BlockSpec((tb, tk), lambda i, j, k: (i, k)),   # x
                pl.BlockSpec((tk, tn), lambda i, j, k: (k, j)),   # W_mu (bf16)
                pl.BlockSpec((tk, tn), lambda i, j, k: (k, j)),   # softplus(W_p)^2 (bf16)
                pl.BlockSpec((1, tn), lambda i, j, k: (0, j)),    # b_mu
                pl.BlockSpec((1, tn), lambda i, j, k: (0, j)),    # softplus(b_p)
                pl.BlockSpec((tb, tn), lambda i, j, k: (i, j)),   # eps_W
                pl.BlockSpec((tb, tn), lambda i, j, k: (i, j)),   # eps_b
            ],
            out_specs=pl.BlockSpec((tb, tn), lambda i, j, k: (i, j)),
            scratch_shapes=[
                pltpu.VMEM((tb, tn), jnp.float32),   # mean accumulator
                pltpu.VMEM((tb, tn), jnp.float32),   # variance accumulator
            ],
        ),
        compiler_params=pltpu.CompilerParams(
            dimension_semantics=("parallel", "parallel", "arbitrary")),
    )(xp, wmup, sw2p, bmup, sbp, ewp, ebp)

    return out[:B, :n_out]


# ----------------------------- references -----------------------------------

def _reference_f32(x, w_mu, w_p, b_mu, b_p, eps_w, eps_b):
    std_w = jnp.logaddexp(0.0, w_p)
    std_b = jnp.logaddexp(0.0, b_p)
    act_mu = x @ w_mu
    act_std = jnp.sqrt(1e-4 + (x * x) @ (std_w * std_w))
    out = act_mu + act_std * eps_w + b_mu + std_b * eps_b
    return jnp.maximum(out, 0.0)


def _reference_matched(x, w_mu, w_p, b_mu, b_p, eps_w, eps_b):
    # Same bf16 operand casting as the kernel (f32 accumulation).
    sw2 = jnp.square(jnp.logaddexp(0.0, w_p)).astype(jnp.bfloat16)
    std_b = jnp.logaddexp(0.0, b_p)
    act_mu = jnp.dot(x.astype(jnp.bfloat16), w_mu.astype(jnp.bfloat16),
                     preferred_element_type=jnp.float32)
    act_var = jnp.dot((x * x).astype(jnp.bfloat16), sw2,
                      preferred_element_type=jnp.float32)
    act_std = jnp.sqrt(1e-4 + act_var)
    out = act_mu + act_std * eps_w + b_mu + std_b * eps_b
    return jnp.maximum(out, 0.0)


if __name__ == "__main__":
    B, width_in, width_out = 8, 32, 32

    key = jax.random.PRNGKey(0)
    k_x, k_wmu, k_wp, k_bmu, k_bp, k_ew, k_eb = jax.random.split(key, 7)

    # Deterministic "parameters" matching the torch init ranges / shapes.
    x = jax.random.normal(k_x, (B, width_in), dtype=jnp.float32)
    w_mu = jax.random.uniform(k_wmu, (width_in, width_out),
                              minval=-0.01, maxval=0.01, dtype=jnp.float32)
    w_p = jax.random.uniform(k_wp, (width_in, width_out),
                             minval=-3.0, maxval=-2.0, dtype=jnp.float32)
    b_mu = jax.random.uniform(k_bmu, (1, width_out),
                              minval=-0.01, maxval=0.01, dtype=jnp.float32)
    b_p = jax.random.uniform(k_bp, (1, width_out),
                             minval=-3.0, maxval=-2.0, dtype=jnp.float32)

    # Local-reparameterization noise (deterministic, sampled in plain JAX).
    eps_w = jax.random.normal(k_ew, (B, width_out), dtype=jnp.float32)
    eps_b = jax.random.normal(k_eb, (B, width_out), dtype=jnp.float32)

    out = local_reparam_block(x, w_mu, w_p, b_mu, b_p, eps_w, eps_b)
    out = jax.block_until_ready(out)
    assert out.shape == (B, width_out)

    # Tight check against a reference with the same bf16 matmul operands.
    ref_m = _reference_matched(x, w_mu, w_p, b_mu, b_p, eps_w, eps_b)
    assert jnp.allclose(out, ref_m, atol=1e-3, rtol=1e-3), "matched-ref mismatch"

    # Looser check against the full-f32 reference (bf16 MXU rounding).
    ref_f = _reference_f32(x, w_mu, w_p, b_mu, b_p, eps_w, eps_b)
    assert jnp.allclose(out, ref_f, atol=5e-2, rtol=5e-2), "f32-ref mismatch"

    print("KERNEL_OK")
</pallas_src>

<mosaic_0001>
module attributes {stable_mosaic.version = 11 : i64} {
  func.func @_local_reparam_kernel(%arg0: i32, %arg1: i32, %arg2: i32, %arg3: memref<8x128xf32, #tpu.memory_space<vmem>>, %arg4: memref<128x128xbf16, #tpu.memory_space<vmem>>, %arg5: memref<128x128xbf16, #tpu.memory_space<vmem>>, %arg6: memref<1x128xf32, #tpu.memory_space<vmem>>, %arg7: memref<1x128xf32, #tpu.memory_space<vmem>>, %arg8: memref<8x128xf32, #tpu.memory_space<vmem>>, %arg9: memref<8x128xf32, #tpu.memory_space<vmem>>, %arg10: memref<8x128xf32, #tpu.memory_space<vmem>>, %arg11: memref<8x128xf32, #tpu.memory_space<vmem>>, %arg12: memref<8x128xf32, #tpu.memory_space<vmem>>) attributes {dimension_semantics = [#tpu.dimension_semantics<parallel>, #tpu.dimension_semantics<parallel>, #tpu.dimension_semantics<arbitrary>], iteration_bounds = array<i64: 1, 1, 1>, scalar_prefetch = 0 : i64, scratch_operands = 2 : i64, tpu.core_type = #tpu.core_type<tc>, window_params = [{transform_indices = @transform_0, window_bounds = array<i64: 8, 128>}, {transform_indices = @transform_1, window_bounds = array<i64: 128, 128>}, {transform_indices = @transform_2, window_bounds = array<i64: 128, 128>}, {transform_indices = @transform_3, window_bounds = array<i64: 1, 128>}, {transform_indices = @transform_4, window_bounds = array<i64: 1, 128>}, {transform_indices = @transform_5, window_bounds = array<i64: 8, 128>}, {transform_indices = @transform_6, window_bounds = array<i64: 8, 128>}, {transform_indices = @transform_7, window_bounds = array<i64: 8, 128>}]} {
    %c0_i32 = arith.constant 0 : i32
    %0 = arith.cmpi eq, %arg2, %c0_i32 : i32
    %1 = arith.extui %0 : i1 to i32
    %c0_i32_0 = arith.constant 0 : i32
    %2 = arith.cmpi ne, %1, %c0_i32_0 : i32
    scf.if %2 {
      %cst_17 = arith.constant 0.000000e+00 : f32
      %20 = vector.broadcast %cst_17 : f32 to vector<8x128xf32>
      %c0_18 = arith.constant 0 : index
      %c0_19 = arith.constant 0 : index
      %21 = vector.load %arg11[%c0_18, %c0_19] : memref<8x128xf32, #tpu.memory_space<vmem>>, vector<8x128xf32>
      tpu.vector_store %arg11[%c0_18, %c0_19], %20 {strides = array<i32>} : memref<8x128xf32, #tpu.memory_space<vmem>>, vector<8x128xf32>,
      %cst_20 = arith.constant 0.000000e+00 : f32
      %22 = vector.broadcast %cst_20 : f32 to vector<8x128xf32>
      %c0_21 = arith.constant 0 : index
      %c0_22 = arith.constant 0 : index
      %23 = vector.load %arg12[%c0_21, %c0_22] : memref<8x128xf32, #tpu.memory_space<vmem>>, vector<8x128xf32>
      tpu.vector_store %arg12[%c0_21, %c0_22], %22 {strides = array<i32>} : memref<8x128xf32, #tpu.memory_space<vmem>>, vector<8x128xf32>,
    } else {
    }
    %c0 = arith.constant 0 : index
    %c0_1 = arith.constant 0 : index
    %3 = vector.load %arg3[%c0, %c0_1] : memref<8x128xf32, #tpu.memory_space<vmem>>, vector<8x128xf32>
    %4 = arith.mulf %3, %3 : vector<8x128xf32>
    %c0_2 = arith.constant 0 : index
    %c0_3 = arith.constant 0 : index
    %5 = vector.load %arg11[%c0_2, %c0_3] : memref<8x128xf32, #tpu.memory_space<vmem>>, vector<8x128xf32>
    %6 = arith.truncf %3 : vector<8x128xf32> to vector<8x128xbf16>
    %c0_4 = arith.constant 0 : index
    %c0_5 = arith.constant 0 : index
    %7 = vector.load %arg4[%c0_4, %c0_5] : memref<128x128xbf16, #tpu.memory_space<vmem>>, vector<128x128xbf16>
    %cst = arith.constant dense<0.000000e+00> : vector<8x128xf32>
    %8 = tpu.matmul %6, %7, %cst {dimension_numbers = #tpu.dot_dimension_numbers<[1], [0], [0], [1], [0, 0, 1, 1], [], []>} : vector<8x128xbf16>, vector<128x128xbf16>, vector<8x128xf32> -> vector<8x128xf32>
    %9 = arith.addf %5, %8 : vector<8x128xf32>
    %c0_6 = arith.constant 0 : index
    %c0_7 = arith.constant 0 : index
    %10 = vector.load %arg11[%c0_6, %c0_7] : memref<8x128xf32, #tpu.memory_space<vmem>>, vector<8x128xf32>
    tpu.vector_store %arg11[%c0_6, %c0_7], %9 {strides = array<i32>} : memref<8x128xf32, #tpu.memory_space<vmem>>, vector<8x128xf32>,
    %c0_8 = arith.constant 0 : index
    %c0_9 = arith.constant 0 : index
    %11 = vector.load %arg12[%c0_8, %c0_9] : memref<8x128xf32, #tpu.memory_space<vmem>>, vector<8x128xf32>
    %12 = arith.truncf %4 : vector<8x128xf32> to vector<8x128xbf16>
    %c0_10 = arith.constant 0 : index
    %c0_11 = arith.constant 0 : index
    %13 = vector.load %arg5[%c0_10, %c0_11] : memref<128x128xbf16, #tpu.memory_space<vmem>>, vector<128x128xbf16>
    %cst_12 = arith.constant dense<0.000000e+00> : vector<8x128xf32>
    %14 = tpu.matmul %12, %13, %cst_12 {dimension_numbers = #tpu.dot_dimension_numbers<[1], [0], [0], [1], [0, 0, 1, 1], [], []>} : vector<8x128xbf16>, vector<128x128xbf16>, vector<8x128xf32> -> vector<8x128xf32>
    %15 = arith.addf %11, %14 : vector<8x128xf32>
    %c0_13 = arith.constant 0 : index
    %c0_14 = arith.constant 0 : index
    %16 = vector.load %arg12[%c0_13, %c0_14] : memref<8x128xf32, #tpu.memory_space<vmem>>, vector<8x128xf32>
    tpu.vector_store %arg12[%c0_13, %c0_14], %15 {strides = array<i32>} : memref<8x128xf32, #tpu.memory_space<vmem>>, vector<8x128xf32>,
    %c0_i32_15 = arith.constant 0 : i32
    %17 = arith.cmpi eq, %arg2, %c0_i32_15 : i32
    %18 = arith.extui %17 : i1 to i32
    %c0_i32_16 = arith.constant 0 : i32
    %19 = arith.cmpi ne, %18, %c0_i32_16 : i32
    scf.if %19 {
      %c0_17 = arith.constant 0 : index
      %c0_18 = arith.constant 0 : index
      %20 = vector.load %arg12[%c0_17, %c0_18] : memref<8x128xf32, #tpu.memory_space<vmem>>, vector<8x128xf32>
      %cst_19 = arith.constant 9.99999974E-5 : f32
      %21 = vector.broadcast %cst_19 : f32 to vector<8x128xf32>
      %22 = arith.addf %21, %20 : vector<8x128xf32>
      %23 = math.sqrt %22 : vector<8x128xf32>
      %c0_20 = arith.constant 0 : index
      %c0_21 = arith.constant 0 : index
      %24 = vector.load %arg11[%c0_20, %c0_21] : memref<8x128xf32, #tpu.memory_space<vmem>>, vector<8x128xf32>
      %c0_22 = arith.constant 0 : index
      %c0_23 = arith.constant 0 : index
      %25 = vector.load %arg8[%c0_22, %c0_23] : memref<8x128xf32, #tpu.memory_space<vmem>>, vector<8x128xf32>
      %26 = arith.mulf %23, %25 : vector<8x128xf32>
      %27 = arith.addf %24, %26 : vector<8x128xf32>
      %c0_24 = arith.constant 0 : index
      %c0_25 = arith.constant 0 : index
      %28 = vector.load %arg6[%c0_24, %c0_25] : memref<1x128xf32, #tpu.memory_space<vmem>>, vector<1x128xf32>
      %29 = vector.broadcast %28 : vector<1x128xf32> to vector<8x128xf32>
      %30 = arith.addf %27, %29 : vector<8x128xf32>
      %c0_26 = arith.constant 0 : index
      %c0_27 = arith.constant 0 : index
      %31 = vector.load %arg7[%c0_26, %c0_27] : memref<1x128xf32, #tpu.memory_space<vmem>>, vector<1x128xf32>
      %c0_28 = arith.constant 0 : index
      %c0_29 = arith.constant 0 : index
      %32 = vector.load %arg9[%c0_28, %c0_29] : memref<8x128xf32, #tpu.memory_space<vmem>>, vector<8x128xf32>
      %33 = vector.broadcast %31 : vector<1x128xf32> to vector<8x128xf32>
      %34 = arith.mulf %33, %32 : vector<8x128xf32>
      %35 = arith.addf %30, %34 : vector<8x128xf32>
      %cst_30 = arith.constant 0.000000e+00 : f32
      %36 = vector.broadcast %cst_30 : f32 to vector<8x128xf32>
      %37 = arith.maximumf %35, %36 : vector<8x128xf32>
      %c0_31 = arith.constant 0 : index
      %c0_32 = arith.constant 0 : index
      %38 = vector.load %arg10[%c0_31, %c0_32] : memref<8x128xf32, #tpu.memory_space<vmem>>, vector<8x128xf32>
      tpu.vector_store %arg10[%c0_31, %c0_32], %37 {strides = array<i32>} : memref<8x128xf32, #tpu.memory_space<vmem>>, vector<8x128xf32>,
    } else {
    }
    return
  }
  func.func @transform_0(%arg0: i32, %arg1: i32, %arg2: i32) -> (i32, i32) {
    %c0_i32 = arith.constant 0 : i32
    return %arg0, %arg2 : i32, i32
  }
  func.func @transform_1(%arg0: i32, %arg1: i32, %arg2: i32) -> (i32, i32) {
    %c0_i32 = arith.constant 0 : i32
    return %arg2, %arg1 : i32, i32
  }
  func.func @transform_2(%arg0: i32, %arg1: i32, %arg2: i32) -> (i32, i32) {
    %c0_i32 = arith.constant 0 : i32
    return %arg2, %arg1 : i32, i32
  }
  func.func @transform_3(%arg0: i32, %arg1: i32, %arg2: i32) -> (i32, i32) {
    %c0_i32 = arith.constant 0 : i32
    %c0_i32_0 = arith.constant 0 : i32
    return %c0_i32, %arg1 : i32, i32
  }
  func.func @transform_4(%arg0: i32, %arg1: i32, %arg2: i32) -> (i32, i32) {
    %c0_i32 = arith.constant 0 : i32
    %c0_i32_0 = arith.constant 0 : i32
    return %c0_i32, %arg1 : i32, i32
  }
  func.func @transform_5(%arg0: i32, %arg1: i32, %arg2: i32) -> (i32, i32) {
    %c0_i32 = arith.constant 0 : i32
    return %arg0, %arg1 : i32, i32
  }
  func.func @transform_6(%arg0: i32, %arg1: i32, %arg2: i32) -> (i32, i32) {
    %c0_i32 = arith.constant 0 : i32
    return %arg0, %arg1 : i32, i32
  }
  func.func @transform_7(%arg0: i32, %arg1: i32, %arg2: i32) -> (i32, i32) {
    %c0_i32 = arith.constant 0 : i32
    return %arg0, %arg1 : i32, i32
  }
}

</mosaic_0001>

<llo_original>
// kernel: local_reparam_block.1
$region0: #{local_reparam_block.1}
  #allocation0 [shape = 'u32[]', space=smem, size = 0x4, offset = 0x4, fixed_abs, tag = 'smem constant byte address 0x4 - core index']
  #allocation1 [shape = 'u32[72,128]{1,0:T(1,128)}', space=vmem, size = 0x9000, scoped, tag = 'internal scratch']
  #allocation2 [shape = 'f32[8,128]{1,0:T(8,128)}', space=vmem, size = 0x1000, scoped, tag = 'scratch operand']
  #allocation3 [shape = 'f32[8,128]{1,0:T(8,128)}', space=vmem, size = 0x1000, scoped, tag = 'scratch operand']
  %s0 = inlined_call_operand.vmem [shape: f32[8,128], index: 0, kind: input, shape index: {}]
  %s1 = inlined_call_operand.vmem [shape: bf16[128,128], index: 1, kind: input, shape index: {}]
  %s2 = inlined_call_operand.vmem [shape: bf16[128,128], index: 2, kind: input, shape index: {}]
  %s3 = inlined_call_operand.vmem [shape: f32[1,128], index: 3, kind: input, shape index: {}]
  %s4 = inlined_call_operand.vmem [shape: f32[1,128], index: 4, kind: input, shape index: {}]
  %s5 = inlined_call_operand.vmem [shape: f32[8,128], index: 5, kind: input, shape index: {}]
  %s6 = inlined_call_operand.vmem [shape: f32[8,128], index: 6, kind: input, shape index: {}]
  %s7 = inlined_call_operand.hbm [shape: f32[8,128], index: 7, kind: output, shape index: {}]
  %s8 = sld [smem:[#allocation0]]
  $region46: #{local_reparam_block.1} parent=0
    _
  %s10 = ssub.s32 1, %s8
  %s11 = scalar_select 0, %s10, %s8
  $region1: #{local_reparam_block.1} parent=0
    #allocation4 [shape = 'u8[4096]{0}', space=vmem, size = 0x1000, scoped, tag = 'output window, operand 0, single buffered']
    #allocation5 [shape = 's32[1]{0}', space=sflag, size = 0x4, scoped, tag = 'scoped memory for local_reparam_block.1']
    %12 = vsyncpa [#allocation5], 0
    // Predicated region
    $region2: #{local_reparam_block.1} parent=1 // pred_check
      _
    $region3: #{local_reparam_block.1} parent=1 // pred_check_branch
      %14 = sbr.rel (0) target = $region5
    $region4: #{local_reparam_block.1} parent=1 // pred_region
      _
    $region5: #{local_reparam_block.1} parent=1 // pred_fallthru
      _
    // Predicated region
    $region6: #{local_reparam_block.1} parent=1 // pred_check
      _
    $region7: #{local_reparam_block.1} parent=1 // pred_check_branch
      %16 = sbr.rel (0) target = $region9
    $region8: #{local_reparam_block.1} parent=1 // pred_region
      _
    $region9: #{local_reparam_block.1} parent=1 // pred_fallthru
      _
    // Predicated region
    $region10: #{local_reparam_block.1} parent=1 // pred_check
      _
    $region11: #{local_reparam_block.1} parent=1 // pred_check_branch
      %18 = sbr.rel (0) target = $region13
    $region12: #{local_reparam_block.1} parent=1 // pred_region
      _
    $region13: #{local_reparam_block.1} parent=1 // pred_fallthru
      _
    // Predicated region
    $region14: #{local_reparam_block.1} parent=1 // pred_check
      _
    $region15: #{local_reparam_block.1} parent=1 // pred_check_branch
      %20 = sbr.rel (0) target = $region17
    $region16: #{local_reparam_block.1} parent=1 // pred_region
      _
    $region17: #{local_reparam_block.1} parent=1 // pred_fallthru
      _
    // Predicated region
    $region18: #{local_reparam_block.1} parent=1 // pred_check
      _
    $region19: #{local_reparam_block.1} parent=1 // pred_check_branch
      %22 = sbr.rel (0) target = $region21
    $region20: #{local_reparam_block.1} parent=1 // pred_region
      _
    $region21: #{local_reparam_block.1} parent=1 // pred_fallthru
      _
    // Predicated region
    $region22: #{local_reparam_block.1} parent=1 // pred_check
      _
    $region23: #{local_reparam_block.1} parent=1 // pred_check_branch
      %24 = sbr.rel (0) target = $region25
    $region24: #{local_reparam_block.1} parent=1 // pred_region
      _
    $region25: #{local_reparam_block.1} parent=1 // pred_fallthru
      _
    // Predicated region
    $region26: #{local_reparam_block.1} parent=1 // pred_check
      _
    $region27: #{local_reparam_block.1} parent=1 // pred_check_branch
      %26 = sbr.rel (0) target = $region29
    $region28: #{local_reparam_block.1} parent=1 // pred_region
      _
    $region29: #{local_reparam_block.1} parent=1 // pred_fallthru
      _
    %p27 = scmp.eq.s32.totalorder 0, 0
    // Predicated region
    $region30: #{local_reparam_block.1} parent=1 // pred_check
      %p28 = pneg %p27
    $region31: #{local_reparam_block.1} parent=1 // pred_check_branch
      %30 = sbr.rel (%p28) target = $region33
    $region32: #{local_reparam_block.1} parent=1 // pred_region
      %31 = vst [vmem:[#allocation2] sm:$0xff] 0.0
      %32 = vst [vmem:[#allocation3] sm:$0xff] 0.0
    $region33: #{local_reparam_block.1} parent=1 // pred_fallthru
      _
    %v33 = vld [vmem:[%s0] sm:$0xff]
    %v34 = vmul.f32 %v33, %v33
    %v35 = vld [vmem:[#allocation2] sm:$0xff]
    %v36 = vpack.c.bf16 %v33, %v33
    %v37 = vld [vmem:[%s1] sm:$0xf]
    %v38 = vld [vmem:[%s1 + $0x4] sm:$0xf]
    %v39 = vld [vmem:[%s1 + $0x8] sm:$0xf]
    %v40 = vld [vmem:[%s1 + $0xc] sm:$0xf]
    %v41 = vld [vmem:[%s1 + $0x10] sm:$0xf]
    %v42 = vld [vmem:[%s1 + $0x14] sm:$0xf]
    %v43 = vld [vmem:[%s1 + $0x18] sm:$0xf]
    %v44 = vld [vmem:[%s1 + $0x1c] sm:$0xf]
    %v45 = vld [vmem:[%s1 + $0x20] sm:$0xf]
    %v46 = vld [vmem:[%s1 + $0x24] sm:$0xf]
    %v47 = vld [vmem:[%s1 + $0x28] sm:$0xf]
    %v48 = vld [vmem:[%s1 + $0x2c] sm:$0xf]
    %v49 = vld [vmem:[%s1 + $0x30] sm:$0xf]
    %v50 = vld [vmem:[%s1 + $0x34] sm:$0xf]
    %v51 = vld [vmem:[%s1 + $0x38] sm:$0xf]
    %v52 = vld [vmem:[%s1 + $0x3c] sm:$0xf]
    %v69 = vunpack.c.l.b16 %v37
    %v70 = vunpack.c.l.b16 %v38
    %v71 = vunpack.c.l.b16 %v39
    %v72 = vunpack.c.l.b16 %v40
    %v73 = vunpack.c.l.b16 %v41
    %v74 = vunpack.c.l.b16 %v42
    %v75 = vunpack.c.l.b16 %v43
    %v76 = vunpack.c.l.b16 %v44
    %v77 = vunpack.c.l.b16 %v45
    %v78 = vunpack.c.l.b16 %v46
    %v79 = vunpack.c.l.b16 %v47
    %v80 = vunpack.c.l.b16 %v48
    %v81 = vunpack.c.l.b16 %v49
    %v82 = vunpack.c.l.b16 %v50
    %v83 = vunpack.c.l.b16 %v51
    %v84 = vunpack.c.l.b16 %v52
    %v85 = vpack.c.b16 %v70, %v69
    %v86 = vpack.c.b16 %v72, %v71
    %v87 = vpack.c.b16 %v74, %v73
    %v88 = vpack.c.b16 %v76, %v75
    %v89 = vpack.c.b16 %v78, %v77
    %v90 = vpack.c.b16 %v80, %v79
    %v91 = vpack.c.b16 %v82, %v81
    %v92 = vpack.c.b16 %v84, %v83
    %101 = vmatpush.bf16.msra.mxu0 %v92
    %102 = vmatpush.bf16.msra.mxu0 %v91
    %103 = vmatpush.bf16.msra.mxu0 %v90
    %104 = vmatpush.bf16.msra.mxu0 %v89
    %105 = vmatpush.bf16.msra.mxu0 %v88
    %106 = vmatpush.bf16.msra.mxu0 %v87
    %107 = vmatpush.bf16.msra.mxu0 %v86
    %108 = vmatpush.bf16.msra.mxu0 %v85
    %109 = vmatmul.bf16.gmra.mxu0 %v36
    %v110 = vpop.f32.mrf.mxu0
    %v111 = vadd.f32 0.0, %v110
    %v112 = vpop.f32.mrf.mxu0
    %113 = vdwg.mxu0
    %v114 = vadd.f32 %v35, %v111
    %115 = vst [vmem:[#allocation2] sm:$0xff] %v114
    %v116 = vld [vmem:[#allocation3] sm:$0xff]
    %v117 = vpack.c.bf16 %v34, %v34
    %v118 = vld [vmem:[%s2] sm:$0xf]
    %v119 = vld [vmem:[%s2 + $0x4] sm:$0xf]
    %v120 = vld [vmem:[%s2 + $0x8] sm:$0xf]
    %v121 = vld [vmem:[%s2 + $0xc] sm:$0xf]
    %v122 = vld [vmem:[%s2 + $0x10] sm:$0xf]
    %v123 = vld [vmem:[%s2 + $0x14] sm:$0xf]
    %v124 = vld [vmem:[%s2 + $0x18] sm:$0xf]
    %v125 = vld [vmem:[%s2 + $0x1c] sm:$0xf]
    %v126 = vld [vmem:[%s2 + $0x20] sm:$0xf]
    %v127 = vld [vmem:[%s2 + $0x24] sm:$0xf]
    %v128 = vld [vmem:[%s2 + $0x28] sm:$0xf]
    %v129 = vld [vmem:[%s2 + $0x2c] sm:$0xf]
    %v130 = vld [vmem:[%s2 + $0x30] sm:$0xf]
    %v131 = vld [vmem:[%s2 + $0x34] sm:$0xf]
    %v132 = vld [vmem:[%s2 + $0x38] sm:$0xf]
    %v133 = vld [vmem:[%s2 + $0x3c] sm:$0xf]
    %v150 = vunpack.c.l.b16 %v118
    %v151 = vunpack.c.l.b16 %v119
    %v152 = vunpack.c.l.b16 %v120
    %v153 = vunpack.c.l.b16 %v121
    %v154 = vunpack.c.l.b16 %v122
    %v155 = vunpack.c.l.b16 %v123
    %v156 = vunpack.c.l.b16 %v124
    %v157 = vunpack.c.l.b16 %v125
    %v158 = vunpack.c.l.b16 %v126
    %v159 = vunpack.c.l.b16 %v127
    %v160 = vunpack.c.l.b16 %v128
    %v161 = vunpack.c.l.b16 %v129
    %v162 = vunpack.c.l.b16 %v130
    %v163 = vunpack.c.l.b16 %v131
    %v164 = vunpack.c.l.b16 %v132
    %v165 = vunpack.c.l.b16 %v133
    %v166 = vpack.c.b16 %v151, %v150
    %v167 = vpack.c.b16 %v153, %v152
    %v168 = vpack.c.b16 %v155, %v154
    %v169 = vpack.c.b16 %v157, %v156
    %v170 = vpack.c.b16 %v159, %v158
    %v171 = vpack.c.b16 %v161, %v160
    %v172 = vpack.c.b16 %v163, %v162
    %v173 = vpack.c.b16 %v165, %v164
    %182 = vmatpush.bf16.msra.mxu0 %v173
    %183 = vmatpush.bf16.msra.mxu0 %v172
    %184 = vmatpush.bf16.msra.mxu0 %v171
    %185 = vmatpush.bf16.msra.mxu0 %v170
    %186 = vmatpush.bf16.msra.mxu0 %v169
    %187 = vmatpush.bf16.msra.mxu0 %v168
    %188 = vmatpush.bf16.msra.mxu0 %v167
    %189 = vmatpush.bf16.msra.mxu0 %v166
    %190 = vmatmul.bf16.gmra.mxu0 %v117
    %v191 = vpop.f32.mrf.mxu0
    %v192 = vadd.f32 0.0, %v191
    %v193 = vpop.f32.mrf.mxu0
    %194 = vdwg.mxu0
    %v195 = vadd.f32 %v116, %v192
    %196 = vst [vmem:[#allocation3] sm:$0xff] %v195
    // Predicated region
    $region34: #{local_reparam_block.1} parent=1 // pred_check
      %p197 = pneg %p27
    $region35: #{local_reparam_block.1} parent=1 // pred_check_branch
      %199 = sbr.rel (%p197) target = $region37
    $region36: #{local_reparam_block.1} parent=1 // pred_region
      %v200 = vld [vmem:[#allocation3] sm:$0xff]
      %v201 = vadd.f32 %v200, 0.0001
      %v202 = vrsqrt.pop %v201
      %v203 = vmul.f32 %v202, %v201
      %v204 = vmul.f32 %v203, %v202
      %v205 = vmul.f32 0.5, %v204
      %v206 = vsub.f32 1.5, %v205
      %v207 = vmul.f32 %v202, %v206
      %v208 = vmul.f32 %v201, %v207
      %vm209 = vcmp.eq.f32.partialorder %v201, inf
      %v210 = vsel %vm209, %v201, %v208
      %vm211 = vcmp.eq.f32.partialorder %v201, 0.0
      %v212 = vand.u32 %v201, 2147483648
      %v213 = vsel %vm211, %v212, %v210
      %v214 = vld [vmem:[#allocation2] sm:$0xff]
      %v215 = vld [vmem:[%s5] sm:$0xff]
      %v216 = vmul.f32 %v213, %v215
      %v217 = vadd.f32 %v214, %v216
      %v218 = vld [vmem:[%s3] sm:$0x1]
      %v220 = vperm.slane %v218, 0
      %v222 = vadd.f32 %v217, %v220
      %v223 = vld [vmem:[%s4] sm:$0x1]
      %v224 = vld [vmem:[%s6] sm:$0xff]
      %v226 = vperm.slane %v223, 0
      %v228 = vmul.f32 %v226, %v224
      %v229 = vadd.f32 %v222, %v228
      %v230 = vmax.f32 %v229, 0.0
      %231 = vst [vmem:[#allocation4] sm:$0xff] %v230
    $region37: #{local_reparam_block.1} parent=1 // pred_fallthru
      _
    // Predicated region
    $region38: #{local_reparam_block.1} parent=1 // pred_check
      _
    $region39: #{local_reparam_block.1} parent=1 // pred_check_branch
      %233 = sbr.rel (0) target = $region41
    $region40: #{local_reparam_block.1} parent=1 // pred_region
      %235 = vsyncadd [#allocation5], 0
      %s237 = sshll.u32 [#allocation4], 4
      %s238 = int_to_ptr.vmem [resolvable:$true] %s237
      %s239 = sshll.u32 %s7, 4
      %s240 = int_to_ptr.hbm [resolvable:$true] %s239
      %242 = dma.vmem_to_hbm [thread:$0]  %s238, 128, %s240, [#allocation5]
    $region41: #{local_reparam_block.1} parent=1 // pred_fallthru
      _
    // Predicated region
    $region42: #{local_reparam_block.1} parent=1 // pred_check
      _
    $region43: #{local_reparam_block.1} parent=1 // pred_check_branch
      %244 = sbr.rel (0) target = $region45
    $region44: #{local_reparam_block.1} parent=1 // pred_region
      %246 = dma.done [#allocation5], 128
    $region45: #{local_reparam_block.1} parent=1 // pred_fallthru
      _
    %247 = vsyncpa [#allocation5], 1

</llo_original>
